<compile_context>
chip_gen: v7x
topology: tpu7x:2x2x1
jax: 0.10.0
libtpu: 0.0.40
codegen_flags: <defaults>
</compile_context>

<pallas_src>
import functools

import jax
import jax.numpy as jnp
from jax.experimental import pallas as pl
from jax.experimental.pallas import tpu as pltpu


# --------------------------------------------------------------------------- #
# Hardware-aware per-block byte budgets
# --------------------------------------------------------------------------- #
@functools.lru_cache(maxsize=None)
def _vmem_budgets():
    """(stats_block_cap_bytes, affine_block_cap_bytes) per TPU generation."""
    cap = None
    try:
        info = pltpu.get_tpu_info()
        cap = getattr(info, "vmem_capacity_bytes", None)
    except Exception:
        cap = None
    if cap is None:
        cap = 128 * 1024 * 1024
    if cap <= 64 * 1024 * 1024:
        # v7x-class: 64 MiB physical VMEM per TensorCore -> smaller blocks.
        return 4 * 1024 * 1024, 3 * 1024 * 1024
    # v5e / v6e: 128 MiB physical VMEM.
    return 8 * 1024 * 1024, 4 * 1024 * 1024


def _choose_tile(hw, c, itemsize, cap_bytes):
    """Lane-tile width: multiple of 128 (or full HW if HW<=128), <= cap_bytes."""
    if hw <= 128:
        return hw                                   # full-extent last dim
    max_lanes = max(128, cap_bytes // (itemsize * max(c, 1)))
    thw = min((max_lanes // 128) * 128, (hw // 128) * 128)
    return max(thw, 128)


def _cdiv(a, b):
    return -(-a // b)


# --------------------------------------------------------------------------- #
# Kernels
# --------------------------------------------------------------------------- #
def _stats_kernel(hw, thw, t_per_chunk, need_mask,
                  x_ref, rmean_ref, s1_ref, s2_ref):
    """Per-(n, s)-slice shifted partial sums over the HW-tile ('arbitrary') axis.

    x_ref:     (1, C, thw) input tile (spatial on lanes, C on sublanes)
    rmean_ref: (1, C, 1)   running mean, used as a numerical shift
    s1_ref:    (1, C, 1)   output block = sum(x - rmean)   for this (n, s)
    s2_ref:    (1, C, 1)   output block = sum((x-rmean)^2) for this (n, s)

    Output blocks are resident across the innermost grid axis (same block
    index for all t), so they act as per-slice accumulators; each (n, s)
    slice owns a distinct output block -> safe under megacore parallelism.
    """
    t = pl.program_id(2)

    @pl.when(t == 0)
    def _():
        s1_ref[...] = jnp.zeros_like(s1_ref)
        s2_ref[...] = jnp.zeros_like(s2_ref)

    xc = x_ref[...].astype(jnp.float32) - rmean_ref[...]        # (1, C, thw)
    if need_mask:
        s = pl.program_id(1)
        start = (s * t_per_chunk + t) * thw
        lane = jax.lax.broadcasted_iota(jnp.int32, xc.shape, 2) + start
        xc = jnp.where(lane < hw, xc, 0.0)                      # zero tail lanes
    s1_ref[...] += jnp.sum(xc, axis=2, keepdims=True)
    s2_ref[...] += jnp.sum(xc * xc, axis=2, keepdims=True)


def _affine_kernel(x_ref, a_ref, b_ref, o_ref):
    """y = x * A + B with per-channel A, B given as (1, C, 1) blocks."""
    o_ref[...] = (x_ref[...].astype(jnp.float32) * a_ref[...]
                  + b_ref[...]).astype(o_ref.dtype)


# --------------------------------------------------------------------------- #
# pallas_call builders (called inside a single enclosing jit)
# --------------------------------------------------------------------------- #
def _stats_partial_sums(x3, rmean3, stats_cap):
    N, C, HW = x3.shape
    itemsize = jnp.dtype(x3.dtype).itemsize
    thw = _choose_tile(HW, C, itemsize, stats_cap)
    n_tiles = _cdiv(HW, thw)
    # >=2 parallel steps even when N == 1 (v7x megacore), without ever mapping
    # a fully out-of-bounds block.
    S = 2 if (N == 1 and n_tiles >= 2 and n_tiles % 2 == 0) else 1
    T = n_tiles // S
    need_mask = (HW % thw) != 0
    kernel = functools.partial(_stats_kernel, HW, thw, T, need_mask)
    vmem_limit = int(2 * C * thw * itemsize + 4 * 1024 * 1024)

    s1, s2 = pl.pallas_call(
        kernel,
        grid=(N, S, T),
        in_specs=[
            pl.BlockSpec((1, C, thw), lambda n, s, t: (n, 0, s * T + t)),
            pl.BlockSpec((1, C, 1), lambda n, s, t: (0, 0, 0)),
        ],
        out_specs=[
            pl.BlockSpec((1, C, 1), lambda n, s, t: (n * S + s, 0, 0)),
            pl.BlockSpec((1, C, 1), lambda n, s, t: (n * S + s, 0, 0)),
        ],
        out_shape=[
            jax.ShapeDtypeStruct((N * S, C, 1), jnp.float32),
            jax.ShapeDtypeStruct((N * S, C, 1), jnp.float32),
        ],
        compiler_params=pltpu.CompilerParams(
            dimension_semantics=("parallel", "parallel", "arbitrary"),
            vmem_limit_bytes=vmem_limit),
    )(x3, rmean3)
    return s1, s2


def _affine_pallas(x3, scale3, shift3, affine_cap):
    N, C, HW = x3.shape
    itemsize = jnp.dtype(x3.dtype).itemsize
    thw = _choose_tile(HW, C, itemsize, affine_cap)
    n_tiles = _cdiv(HW, thw)
    vmem_limit = int(4 * C * thw * itemsize + 4 * 1024 * 1024)

    return pl.pallas_call(
        _affine_kernel,
        grid=(N, n_tiles),
        in_specs=[
            pl.BlockSpec((1, C, thw), lambda n, t: (n, 0, t)),
            pl.BlockSpec((1, C, 1), lambda n, t: (0, 0, 0)),
            pl.BlockSpec((1, C, 1), lambda n, t: (0, 0, 0)),
        ],
        out_specs=pl.BlockSpec((1, C, thw), lambda n, t: (n, 0, t)),
        out_shape=jax.ShapeDtypeStruct((N, C, HW), x3.dtype),
        compiler_params=pltpu.CompilerParams(
            dimension_semantics=("parallel", "parallel"),
            vmem_limit_bytes=vmem_limit),
    )(x3, scale3, shift3)


# --------------------------------------------------------------------------- #
# Whole-forward jits (one dispatch per training / eval step)
# --------------------------------------------------------------------------- #
def _train_forward_impl(x, running_mean, running_std, weight, bias,
                        rmax, dmax, eaf,
                        *, eps, affine, stats_cap, affine_cap):
    N, C, H, W = x.shape
    HW = H * W
    x3 = x.reshape(N, C, HW)                         # free reshape, no transpose
    rm = running_mean.astype(jnp.float32)
    rs = running_std.astype(jnp.float32)

    # ---- pass 1: streamed per-slice partial sums (Pallas) -------------------
    s1, s2 = _stats_partial_sums(x3, rm.reshape(1, C, 1), stats_cap)

    # ---- tiny combine + finalize (plain JAX, fused inside this jit) ---------
    inv_m = 1.0 / float(N * HW)
    m1 = s1.sum(axis=0).reshape(C) * inv_m           # E[x - rmean]
    m2 = s2.sum(axis=0).reshape(C) * inv_m           # E[(x - rmean)^2]
    var = jnp.maximum(m2 - m1 * m1, 0.0)             # biased (unbiased=False)
    mean_c = rm + m1
    std_c = jnp.sqrt(var) + eps                      # eps AFTER sqrt (torch)

    # ---- (C,)-sized renorm glue: fold r, d and the affine into scale/shift --
    r = jnp.clip(std_c / rs, 1.0 / rmax, rmax)
    d = jnp.clip((mean_c - rm) / rs, -dmax, dmax)
    if affine:
        w = weight.astype(jnp.float32)
        b = bias.astype(jnp.float32)
    else:
        w = jnp.ones((C,), jnp.float32)
        b = jnp.zeros((C,), jnp.float32)
    scale = w * r / std_c                            # A = w * r / std
    shift = w * d - mean_c * scale + b               # B = w*(d - mean*r/std) + b

    # ---- pass 2: y = x * A + B (Pallas) --------------------------------------
    y3 = _affine_pallas(x3, scale.reshape(1, C, 1), shift.reshape(1, C, 1),
                        affine_cap)

    # ---- running-stat EMA (returned; caller stores) --------------------------
    new_rm = rm + eaf * (mean_c - rm)
    new_rs = rs + eaf * (std_c - rs)
    return y3.reshape(N, C, H, W), new_rm, new_rs


_train_forward = jax.jit(
    _train_forward_impl,
    static_argnames=("eps", "affine", "stats_cap", "affine_cap"))


def _eval_forward_impl(x, running_mean, running_std, weight, bias,
                       *, eps, affine_cap):
    N, C, H, W = x.shape
    x3 = x.reshape(N, C, H * W)
    # NOTE: mirrors the PyTorch module's F.batch_norm(training=False) call:
    # running_std is (intentionally) passed in the VARIANCE slot, so eps is
    # added inside rsqrt (different from training's sqrt(var)+eps). Keep it.
    rm = running_mean.astype(jnp.float32)
    rs = running_std.astype(jnp.float32)
    scale = weight.astype(jnp.float32) * jax.lax.rsqrt(rs + eps)
    shift = bias.astype(jnp.float32) - rm * scale
    y3 = _affine_pallas(x3, scale.reshape(1, C, 1), shift.reshape(1, C, 1),
                        affine_cap)
    return y3.reshape(N, C, H, W)


_eval_forward = jax.jit(_eval_forward_impl,
                        static_argnames=("eps", "affine_cap"))


# --------------------------------------------------------------------------- #
# Module-like wrapper (buffers / num_batches_tracked are host-side state)
# --------------------------------------------------------------------------- #
class BatchRenorm:
    def __init__(self, num_features, eps=1e-5, momentum=0.1, affine=True):
        self.num_features = num_features
        self.eps = float(eps)
        self.momentum = momentum
        self.affine = affine
        # reset_parameters(): weight -> ones, bias -> zeros
        self.weight = jnp.ones((num_features,), jnp.float32)
        self.bias = jnp.zeros((num_features,), jnp.float32)
        # reset_running_stats()
        self.running_mean = jnp.zeros((num_features,), jnp.float32)
        self.running_std = jnp.ones((num_features,), jnp.float32)
        self.num_batches_tracked = 0
        self.training = True
        self._stats_cap, self._affine_cap = _vmem_budgets()

    @property
    def rmax(self):
        return float(min(max(2.0 / 35000.0 * self.num_batches_tracked
                             + 25.0 / 35.0, 1.0), 3.0))

    @property
    def dmax(self):
        return float(min(max(5.0 / 20000.0 * self.num_batches_tracked
                             - 25.0 / 20.0, 0.0), 5.0))

    def __call__(self, x):
        N, C, H, W = x.shape
        assert C == self.num_features

        if self.training:
            self.num_batches_tracked += 1
            eaf = (1.0 / float(self.num_batches_tracked)
                   if self.momentum is None else float(self.momentum))
            y, new_rm, new_rs = _train_forward(
                x, self.running_mean, self.running_std, self.weight, self.bias,
                jnp.float32(self.rmax), jnp.float32(self.dmax), jnp.float32(eaf),
                eps=self.eps, affine=self.affine,
                stats_cap=self._stats_cap, affine_cap=self._affine_cap)
            self.running_mean = new_rm
            self.running_std = new_rs
            return y
        return _eval_forward(x, self.running_mean, self.running_std,
                             self.weight, self.bias,
                             eps=self.eps, affine_cap=self._affine_cap)


# --------------------------------------------------------------------------- #
# Pure-JAX reference (training mode) for validation
# --------------------------------------------------------------------------- #
def _ref_train(x, rm, rs, w, b, eps, rmax, dmax, affine, eaf):
    dims = (0, 2, 3)
    mean = x.mean(dims)
    mb = mean.reshape(1, -1, 1, 1)
    std = jnp.sqrt(((x - mb) ** 2).mean(dims)) + eps
    sb = std.reshape(1, -1, 1, 1)
    r = jnp.clip(std / rs, 1.0 / rmax, rmax).reshape(1, -1, 1, 1)
    d = jnp.clip((mean - rm) / rs, -dmax, dmax).reshape(1, -1, 1, 1)
    y = (x - mb) / sb * r + d
    if affine:
        y = w.reshape(1, -1, 1, 1) * y + b.reshape(1, -1, 1, 1)
    new_rm = rm + eaf * (mean - rm)
    new_rs = rs + eaf * (std - rs)
    return y, new_rm, new_rs


if __name__ == "__main__":
    key = jax.random.PRNGKey(0)
    N, C, H, W = 2, 4, 16, 16
    k0, k1, k2 = jax.random.split(key, 3)
    x = jax.random.normal(k0, (N, C, H, W), jnp.float32) * 2.0 + 0.5

    bn = BatchRenorm(C)

    # --- forward 1: fresh state (num_batches_tracked=0 -> rmax=1, dmax=0) ---
    rmax0 = float(min(max(2.0 / 35000.0 * 1 + 25.0 / 35.0, 1.0), 3.0))
    dmax0 = float(min(max(5.0 / 20000.0 * 1 - 25.0 / 20.0, 0.0), 5.0))
    ref0, ref_rm0, ref_rs0 = _ref_train(
        x, bn.running_mean, bn.running_std, bn.weight, bn.bias,
        bn.eps, rmax0, dmax0, bn.affine, 0.1)
    out0 = jax.block_until_ready(bn(x))
    assert jnp.allclose(out0, ref0, rtol=1e-4, atol=1e-4), "mismatch (fresh y)"
    assert jnp.allclose(bn.running_mean, ref_rm0, rtol=1e-4, atol=1e-4), \
        "mismatch (running_mean EMA)"
    assert jnp.allclose(bn.running_std, ref_rs0, rtol=1e-4, atol=1e-4), \
        "mismatch (running_std EMA)"

    # --- forward 2: exercise the r/d clamp path with non-trivial state ------
    bn.num_batches_tracked = 30000
    bn.running_mean = jax.random.normal(k1, (C,), jnp.float32) * 0.3
    bn.running_std = jnp.abs(jax.random.normal(k2, (C,), jnp.float32)) + 0.5
    rmax1 = float(min(max(2.0 / 35000.0 * 30001 + 25.0 / 35.0, 1.0), 3.0))
    dmax1 = float(min(max(5.0 / 20000.0 * 30001 - 25.0 / 20.0, 0.0), 5.0))
    ref1, _, _ = _ref_train(
        x, bn.running_mean, bn.running_std, bn.weight, bn.bias,
        bn.eps, rmax1, dmax1, bn.affine, 0.1)
    out1 = jax.block_until_ready(bn(x))
    assert jnp.allclose(out1, ref1, rtol=1e-4, atol=1e-4), "mismatch (renorm y)"

    # --- eval mode path (F.batch_norm with running_std in the var slot) -----
    bn.training = False
    out2 = jax.block_until_ready(bn(x))
    ref2 = ((x - bn.running_mean.reshape(1, C, 1, 1))
            * jax.lax.rsqrt(bn.running_std.reshape(1, C, 1, 1) + bn.eps)
            * bn.weight.reshape(1, C, 1, 1) + bn.bias.reshape(1, C, 1, 1))
    assert jnp.allclose(out2, ref2, rtol=1e-4, atol=1e-4), "mismatch (eval mode)"

    print("KERNEL_OK")
</pallas_src>

<mosaic_0001>
module attributes {stable_mosaic.version = 11 : i64} {
  func.func @_stats_kernel(%arg0: i32, %arg1: i32, %arg2: i32, %arg3: memref<1x4x256xf32, #tpu.memory_space<vmem>>, %arg4: memref<1x4x1xf32, #tpu.memory_space<vmem>>, %arg5: memref<1x4x1xf32, #tpu.memory_space<vmem>>, %arg6: memref<1x4x1xf32, #tpu.memory_space<vmem>>) attributes {dimension_semantics = [#tpu.dimension_semantics<parallel>, #tpu.dimension_semantics<parallel>, #tpu.dimension_semantics<arbitrary>], iteration_bounds = array<i64: 2, 1, 1>, scalar_prefetch = 0 : i64, scratch_operands = 0 : i64, tpu.core_type = #tpu.core_type<tc>, window_params = [{transform_indices = @transform_0, window_bounds = array<i64: 1, 4, 256>}, {pipeline_mode = #tpu.pipeline_mode<synchronous>, transform_indices = @transform_1, window_bounds = array<i64: 1, 4, 1>}, {transform_indices = @transform_2, window_bounds = array<i64: 1, 4, 1>}, {transform_indices = @transform_3, window_bounds = array<i64: 1, 4, 1>}]} {
    %c0_i32 = arith.constant 0 : i32
    %0 = arith.cmpi eq, %arg2, %c0_i32 : i32
    %1 = arith.extui %0 : i1 to i32
    %c0_i32_0 = arith.constant 0 : i32
    %2 = arith.cmpi ne, %1, %c0_i32_0 : i32
    scf.if %2 {
      %cst_19 = arith.constant 0.000000e+00 : f32
      %18 = vector.broadcast %cst_19 : f32 to vector<1x4x1xf32>
      %c0_20 = arith.constant 0 : index
      %c0_21 = arith.constant 0 : index
      %c0_22 = arith.constant 0 : index
      %19 = vector.load %arg5[%c0_20, %c0_21, %c0_22] : memref<1x4x1xf32, #tpu.memory_space<vmem>>, vector<1x4x1xf32>
      tpu.vector_store %arg5[%c0_20, %c0_21, %c0_22], %18 {strides = array<i32>} : memref<1x4x1xf32, #tpu.memory_space<vmem>>, vector<1x4x1xf32>,
      %cst_23 = arith.constant 0.000000e+00 : f32
      %20 = vector.broadcast %cst_23 : f32 to vector<1x4x1xf32>
      %c0_24 = arith.constant 0 : index
      %c0_25 = arith.constant 0 : index
      %c0_26 = arith.constant 0 : index
      %21 = vector.load %arg6[%c0_24, %c0_25, %c0_26] : memref<1x4x1xf32, #tpu.memory_space<vmem>>, vector<1x4x1xf32>
      tpu.vector_store %arg6[%c0_24, %c0_25, %c0_26], %20 {strides = array<i32>} : memref<1x4x1xf32, #tpu.memory_space<vmem>>, vector<1x4x1xf32>,
    } else {
    }
    %c0 = arith.constant 0 : index
    %c0_1 = arith.constant 0 : index
    %c0_2 = arith.constant 0 : index
    %3 = vector.load %arg3[%c0, %c0_1, %c0_2] : memref<1x4x256xf32, #tpu.memory_space<vmem>>, vector<1x4x256xf32>
    %c0_3 = arith.constant 0 : index
    %c0_4 = arith.constant 0 : index
    %c0_5 = arith.constant 0 : index
    %4 = vector.load %arg4[%c0_3, %c0_4, %c0_5] : memref<1x4x1xf32, #tpu.memory_space<vmem>>, vector<1x4x1xf32>
    %5 = vector.broadcast %4 : vector<1x4x1xf32> to vector<1x4x256xf32>
    %6 = arith.subf %3, %5 : vector<1x4x256xf32>
    %c0_6 = arith.constant 0 : index
    %c0_7 = arith.constant 0 : index
    %c0_8 = arith.constant 0 : index
    %7 = vector.load %arg5[%c0_6, %c0_7, %c0_8] : memref<1x4x1xf32, #tpu.memory_space<vmem>>, vector<1x4x1xf32>
    %cst = arith.constant dense<0.000000e+00> : vector<1x4xf32>
    %8 = vector.multi_reduction <add>, %6, %cst [2] : vector<1x4x256xf32> to vector<1x4xf32>
    %9 = vector.shape_cast %8 : vector<1x4xf32> to vector<1x4x1xf32>
    %10 = arith.addf %7, %9 : vector<1x4x1xf32>
    %c0_9 = arith.constant 0 : index
    %c0_10 = arith.constant 0 : index
    %c0_11 = arith.constant 0 : index
    %11 = vector.load %arg5[%c0_9, %c0_10, %c0_11] : memref<1x4x1xf32, #tpu.memory_space<vmem>>, vector<1x4x1xf32>
    tpu.vector_store %arg5[%c0_9, %c0_10, %c0_11], %10 {strides = array<i32>} : memref<1x4x1xf32, #tpu.memory_space<vmem>>, vector<1x4x1xf32>,
    %c0_12 = arith.constant 0 : index
    %c0_13 = arith.constant 0 : index
    %c0_14 = arith.constant 0 : index
    %12 = vector.load %arg6[%c0_12, %c0_13, %c0_14] : memref<1x4x1xf32, #tpu.memory_space<vmem>>, vector<1x4x1xf32>
    %13 = arith.mulf %6, %6 : vector<1x4x256xf32>
    %cst_15 = arith.constant dense<0.000000e+00> : vector<1x4xf32>
    %14 = vector.multi_reduction <add>, %13, %cst_15 [2] : vector<1x4x256xf32> to vector<1x4xf32>
    %15 = vector.shape_cast %14 : vector<1x4xf32> to vector<1x4x1xf32>
    %16 = arith.addf %12, %15 : vector<1x4x1xf32>
    %c0_16 = arith.constant 0 : index
    %c0_17 = arith.constant 0 : index
    %c0_18 = arith.constant 0 : index
    %17 = vector.load %arg6[%c0_16, %c0_17, %c0_18] : memref<1x4x1xf32, #tpu.memory_space<vmem>>, vector<1x4x1xf32>
    tpu.vector_store %arg6[%c0_16, %c0_17, %c0_18], %16 {strides = array<i32>} : memref<1x4x1xf32, #tpu.memory_space<vmem>>, vector<1x4x1xf32>,
    return
  }
  func.func @transform_0(%arg0: i32, %arg1: i32, %arg2: i32) -> (i32, i32, i32) {
    %c1_i32 = arith.constant 1 : i32
    %0 = arith.muli %arg1, %c1_i32 : i32
    %1 = arith.addi %0, %arg2 : i32
    %c0_i32 = arith.constant 0 : i32
    %c0_i32_0 = arith.constant 0 : i32
    return %arg0, %c0_i32, %1 : i32, i32, i32
  }
  func.func @transform_1(%arg0: i32, %arg1: i32, %arg2: i32) -> (i32, i32, i32) {
    %c0_i32 = arith.constant 0 : i32
    %c0_i32_0 = arith.constant 0 : i32
    %c0_i32_1 = arith.constant 0 : i32
    %c0_i32_2 = arith.constant 0 : i32
    return %c0_i32, %c0_i32_0, %c0_i32_1 : i32, i32, i32
  }
  func.func @transform_2(%arg0: i32, %arg1: i32, %arg2: i32) -> (i32, i32, i32) {
    %c1_i32 = arith.constant 1 : i32
    %0 = arith.muli %arg0, %c1_i32 : i32
    %1 = arith.addi %0, %arg1 : i32
    %c0_i32 = arith.constant 0 : i32
    %c0_i32_0 = arith.constant 0 : i32
    %c0_i32_1 = arith.constant 0 : i32
    return %1, %c0_i32, %c0_i32_0 : i32, i32, i32
  }
  func.func @transform_3(%arg0: i32, %arg1: i32, %arg2: i32) -> (i32, i32, i32) {
    %c1_i32 = arith.constant 1 : i32
    %0 = arith.muli %arg0, %c1_i32 : i32
    %1 = arith.addi %0, %arg1 : i32
    %c0_i32 = arith.constant 0 : i32
    %c0_i32_0 = arith.constant 0 : i32
    %c0_i32_1 = arith.constant 0 : i32
    return %1, %c0_i32, %c0_i32_0 : i32, i32, i32
  }
}

module attributes {stable_mosaic.version = 11 : i64} {
  func.func @_affine_kernel(%arg0: i32, %arg1: i32, %arg2: memref<1x4x256xf32, #tpu.memory_space<vmem>>, %arg3: memref<1x4x1xf32, #tpu.memory_space<vmem>>, %arg4: memref<1x4x1xf32, #tpu.memory_space<vmem>>, %arg5: memref<1x4x256xf32, #tpu.memory_space<vmem>>) attributes {dimension_semantics = [#tpu.dimension_semantics<parallel>, #tpu.dimension_semantics<parallel>], iteration_bounds = array<i64: 2, 1>, scalar_prefetch = 0 : i64, scratch_operands = 0 : i64, tpu.core_type = #tpu.core_type<tc>, window_params = [{transform_indices = @transform_0, window_bounds = array<i64: 1, 4, 256>}, {pipeline_mode = #tpu.pipeline_mode<synchronous>, transform_indices = @transform_1, window_bounds = array<i64: 1, 4, 1>}, {pipeline_mode = #tpu.pipeline_mode<synchronous>, transform_indices = @transform_2, window_bounds = array<i64: 1, 4, 1>}, {transform_indices = @transform_3, window_bounds = array<i64: 1, 4, 256>}]} {
    %c0 = arith.constant 0 : index
    %c0_0 = arith.constant 0 : index
    %c0_1 = arith.constant 0 : index
    %0 = vector.load %arg2[%c0, %c0_0, %c0_1] : memref<1x4x256xf32, #tpu.memory_space<vmem>>, vector<1x4x256xf32>
    %c0_2 = arith.constant 0 : index
    %c0_3 = arith.constant 0 : index
    %c0_4 = arith.constant 0 : index
    %1 = vector.load %arg3[%c0_2, %c0_3, %c0_4] : memref<1x4x1xf32, #tpu.memory_space<vmem>>, vector<1x4x1xf32>
    %2 = vector.broadcast %1 : vector<1x4x1xf32> to vector<1x4x256xf32>
    %3 = arith.mulf %0, %2 : vector<1x4x256xf32>
    %c0_5 = arith.constant 0 : index
    %c0_6 = arith.constant 0 : index
    %c0_7 = arith.constant 0 : index
    %4 = vector.load %arg4[%c0_5, %c0_6, %c0_7] : memref<1x4x1xf32, #tpu.memory_space<vmem>>, vector<1x4x1xf32>
    %5 = vector.broadcast %4 : vector<1x4x1xf32> to vector<1x4x256xf32>
    %6 = arith.addf %3, %5 : vector<1x4x256xf32>
    %c0_8 = arith.constant 0 : index
    %c0_9 = arith.constant 0 : index
    %c0_10 = arith.constant 0 : index
    %7 = vector.load %arg5[%c0_8, %c0_9, %c0_10] : memref<1x4x256xf32, #tpu.memory_space<vmem>>, vector<1x4x256xf32>
    tpu.vector_store %arg5[%c0_8, %c0_9, %c0_10], %6 {strides = array<i32>} : memref<1x4x256xf32, #tpu.memory_space<vmem>>, vector<1x4x256xf32>,
    return
  }
  func.func @transform_0(%arg0: i32, %arg1: i32) -> (i32, i32, i32) {
    %c0_i32 = arith.constant 0 : i32
    %c0_i32_0 = arith.constant 0 : i32
    return %arg0, %c0_i32, %arg1 : i32, i32, i32
  }
  func.func @transform_1(%arg0: i32, %arg1: i32) -> (i32, i32, i32) {
    %c0_i32 = arith.constant 0 : i32
    %c0_i32_0 = arith.constant 0 : i32
    %c0_i32_1 = arith.constant 0 : i32
    %c0_i32_2 = arith.constant 0 : i32
    return %c0_i32, %c0_i32_0, %c0_i32_1 : i32, i32, i32
  }
  func.func @transform_2(%arg0: i32, %arg1: i32) -> (i32, i32, i32) {
    %c0_i32 = arith.constant 0 : i32
    %c0_i32_0 = arith.constant 0 : i32
    %c0_i32_1 = arith.constant 0 : i32
    %c0_i32_2 = arith.constant 0 : i32
    return %c0_i32, %c0_i32_0, %c0_i32_1 : i32, i32, i32
  }
  func.func @transform_3(%arg0: i32, %arg1: i32) -> (i32, i32, i32) {
    %c0_i32 = arith.constant 0 : i32
    %c0_i32_0 = arith.constant 0 : i32
    return %arg0, %c0_i32, %arg1 : i32, i32, i32
  }
}

</mosaic_0001>

<llo_original>
// kernel: _train_forward_impl.3
$region0: #{_train_forward_impl.3}
  #allocation0 [shape = 'u32[]', space=smem, size = 0x4, offset = 0x4, fixed_abs, tag = 'smem constant byte address 0x4 - core index']
  #allocation1 [shape = 'u32[144,128]{1,0:T(1,128)}', space=vmem, size = 0x12000, scoped, tag = 'internal scratch']
  %s0 = inlined_call_operand.vmem [shape: f32[2,4,256], index: 0, kind: input, shape index: {}]
  %s1 = inlined_call_operand.vmem [shape: f32[1,4,1], index: 1, kind: input, shape index: {}]
  %s2 = inlined_call_operand.vmem [shape: f32[1,4,1], index: 2, kind: input, shape index: {}]
  %s3 = inlined_call_operand.vmem [shape: f32[2,4,256], index: 3, kind: output, shape index: {}]
  %s4 = sld [smem:[#allocation0]]
  $region45: #{_train_forward_impl.3} parent=0
    _
  %s6 = ssub.s32 1, %s4
  %s7 = scalar_select 0, %s6, %s4
  loop: start=0, step=1, limit=4
  $region2: #{_train_forward_impl.3} parent=0 // loop_pre_header
    _
  $region3: #{_train_forward_impl.3} parent=0 // loop_header
    %s9 = sphi 0, %s13
    %p10 = scmp.ge.s32.totalorder %s9, 4
    %s16 = sphi 0, %s28
    %s17 = sphi 0, %s24
    %s18 = sphi 0, %s16
    %s19 = sphi 0, %s17
    %s20 = sphi 0, %s18
    %s21 = sphi 0, %s19
    %s33 = sphi 0, %s35
    %s36 = sphi 0, %s33
    %s37 = sphi 0, %s36
    %s53 = sphi 0, %s37
    %s57 = sphi 0, %s57
    %s59 = sphi 0, %s57
    %s60 = sphi 0, %s59
    %s74 = sphi 0, %s60
    %s78 = sphi 0, %s78
    %s80 = sphi 0, %s78
    %s81 = sphi 0, %s80
    %s95 = sphi 0, %s81
    %s103 = sphi 0, %s105
    %s106 = sphi 0, %s103
    %s107 = sphi 0, %s106
    %s123 = sphi 0, %s107
  $region4: #{_train_forward_impl.3} parent=0 // loop_header_branch
    %12 = sbr.rel (%p10) target = $region8
  $region5: #{_train_forward_impl.3} parent=0 // loop_body
    %s14 = ssub.s32 %s9, 1
    %s15 = ssub.s32 %s9, 2
    %s22 = sadd.s32 1, %s17
    %p23 = scmp.ge.s32.totalorder %s22, 1
    %s24 = scalar_select %p23, 0, %s22
    %s25 = sadd.s32 1, %s16
    %s26 = scalar_select %p23, %s25, %s16
    %p27 = scmp.ge.s32.totalorder %s26, 2
    %s28 = scalar_select %p27, 0, %s26
    %s29 = ssub.s32 %s16, %s28
    %s30 = ssub.s32 %s17, %s24
    %s31 = sor.u32 %s29, %s30
    %p32 = scmp.eq.s32.totalorder %s31, 0
    %s34 = sadd.s32 %s33, 1
    %s35 = scalar_select %p32, %s33, %s34
    %p38 = pneg %p32
    %p39 = scmp.eq.s32.totalorder %s9, 1
    %p40 = por %p38, %p39
    %p41 = scmp.ne.s32.totalorder %s33, %s36
    %p42 = scmp.eq.s32.totalorder %s9, 0
    %p43 = por %p41, %p42
    %p44 = scmp.ne.s32.totalorder %s33, %s36
    %p45 = scmp.eq.s32.totalorder %s14, 1
    %p46 = por %p44, %p45
    %p47 = scmp.ne.s32.totalorder %s36, %s37
    %p48 = scmp.eq.s32.totalorder %s14, 0
    %p49 = por %p47, %p48
    %p50 = scmp.ne.s32.totalorder %s36, %s37
    %p51 = scmp.eq.s32.totalorder %s15, 1
    %p52 = por %p50, %p51
    %p54 = scmp.ne.s32.totalorder %s37, %s53
    %p55 = scmp.eq.s32.totalorder %s15, 0
    %p56 = por %p54, %p55
    %s58 = sadd.s32 %s57, 1
    %p61 = scmp.eq.s32.totalorder %s9, 1
    %p62 = scmp.ne.s32.totalorder %s57, %s59
    %p63 = scmp.eq.s32.totalorder %s9, 0
    %p64 = por %p62, %p63
    %p65 = scmp.ne.s32.totalorder %s57, %s59
    %p66 = scmp.eq.s32.totalorder %s14, 1
    %p67 = por %p65, %p66
    %p68 = scmp.ne.s32.totalorder %s59, %s60
    %p69 = scmp.eq.s32.totalorder %s14, 0
    %p70 = por %p68, %p69
    %p71 = scmp.ne.s32.totalorder %s59, %s60
    %p72 = scmp.eq.s32.totalorder %s15, 1
    %p73 = por %p71, %p72
    %p75 = scmp.ne.s32.totalorder %s60, %s74
    %p76 = scmp.eq.s32.totalorder %s15, 0
    %p77 = por %p75, %p76
    %s79 = sadd.s32 %s78, 1
    %p82 = scmp.eq.s32.totalorder %s9, 1
    %p83 = scmp.ne.s32.totalorder %s78, %s80
    %p84 = scmp.eq.s32.totalorder %s9, 0
    %p85 = por %p83, %p84
    %p86 = scmp.ne.s32.totalorder %s78, %s80
    %p87 = scmp.eq.s32.totalorder %s14, 1
    %p88 = por %p86, %p87
    %p89 = scmp.ne.s32.totalorder %s80, %s81
    %p90 = scmp.eq.s32.totalorder %s14, 0
    %p91 = por %p89, %p90
    %p92 = scmp.ne.s32.totalorder %s80, %s81
    %p93 = scmp.eq.s32.totalorder %s15, 1
    %p94 = por %p92, %p93
    %p96 = scmp.ne.s32.totalorder %s81, %s95
    %p97 = scmp.eq.s32.totalorder %s15, 0
    %p98 = por %p96, %p97
    %s99 = ssub.s32 %s16, %s28
    %s100 = ssub.s32 %s17, %s24
    %s101 = sor.u32 %s99, %s100
    %p102 = scmp.eq.s32.totalorder %s101, 0
    %s104 = sadd.s32 %s103, 1
    %s105 = scalar_select %p102, %s103, %s104
    %p108 = pneg %p102
    %p109 = scmp.eq.s32.totalorder %s9, 1
    %p110 = por %p108, %p109
    %p111 = scmp.ne.s32.totalorder %s103, %s106
    %p112 = scmp.eq.s32.totalorder %s9, 0
    %p113 = por %p111, %p112
    %p114 = scmp.ne.s32.totalorder %s103, %s106
    %p115 = scmp.eq.s32.totalorder %s14, 1
    %p116 = por %p114, %p115
    %p117 = scmp.ne.s32.totalorder %s106, %s107
    %p118 = scmp.eq.s32.totalorder %s14, 0
    %p119 = por %p117, %p118
    %p120 = scmp.ne.s32.totalorder %s106, %s107
    %p121 = scmp.eq.s32.totalorder %s15, 1
    %p122 = por %p120, %p121
    %p124 = scmp.ne.s32.totalorder %s107, %s123
    %p125 = scmp.eq.s32.totalorder %s15, 0
    %p126 = por %p124, %p125
    %p127 = scmp.le.s32.totalorder 1, %s9
    %p128 = scmp.lt.s32.totalorder %s9, 3
    %p129 = pnand %p127, %p128
    %p130 = pneg %p129
    // Predicated region
    $region9: #{_train_forward_impl.3} parent=5 // pred_check
      _
    $region10: #{_train_forward_impl.3} parent=5 // pred_check_branch
      %132 = sbr.rel (%p129) target = $region12
    $region11: #{_train_forward_impl.3} parent=5 // pred_region
      %s133 = ssub.s32 %s9, 1
      // Predicated region
      $region13: #{_train_forward_impl.3} parent=11 // pred_check
        %p134 = pneg %p70
      $region14: #{_train_forward_impl.3} parent=11 // pred_check_branch
        %136 = sbr.rel (%p134) target = $region16
      $region15: #{_train_forward_impl.3} parent=11 // pred_region
        _
      $region16: #{_train_forward_impl.3} parent=11 // pred_fallthru
        _
      // Predicated region
      $region17: #{_train_forward_impl.3} parent=11 // pred_check
        %p137 = pneg %p91
      $region18: #{_train_forward_impl.3} parent=11 // pred_check_branch
        %139 = sbr.rel (%p137) target = $region20
      $region19: #{_train_forward_impl.3} parent=11 // pred_region
        _
      $region20: #{_train_forward_impl.3} parent=11 // pred_fallthru
        _
    $region12: #{_train_forward_impl.3} parent=5 // pred_fallthru
      _
    %p140 = scmp.lt.s32.totalorder %s9, 2
    // Predicated region
    $region21: #{_train_forward_impl.3} parent=5 // pred_check
      %p141 = pneg %p140
    $region22: #{_train_forward_impl.3} parent=5 // pred_check_branch
      %143 = sbr.rel (%p141) target = $region24
    $region23: #{_train_forward_impl.3} parent=5 // pred_region
      // Predicated region
      $region25: #{_train_forward_impl.3} parent=23 // pred_check
        %p144 = pneg %p43
      $region26: #{_train_forward_impl.3} parent=23 // pred_check_branch
        %146 = sbr.rel (%p144) target = $region28
      $region27: #{_train_forward_impl.3} parent=23 // pred_region
        %s147 = smul.u32 2, %s17
        %p148 = scmp.lt.s32.totalorder %s16, 1
        %s149 = scalar_select %p148, %s16, 1
        %p150 = scmp.lt.s32.totalorder %s147, 1
        %s151 = scalar_select %p150, %s147, 1
        %s152 = smul.addr %s149, 2
        %s153 = sadd.s32 %s151, %s152
        %s154 = smul.addr %s153, 4
        %s155 = scalar_lea.vmem %s0, %s154
        %s156 = smul.u32 2, %s17
      $region28: #{_train_forward_impl.3} parent=23 // pred_fallthru
        _
    $region24: #{_train_forward_impl.3} parent=5 // pred_fallthru
      _
    %p157 = scmp.le.s32.totalorder 1, %s9
    %p158 = scmp.lt.s32.totalorder %s9, 3
    %p159 = pnand %p157, %p158
    %p160 = pneg %p159
    // Predicated region
    $region29: #{_train_forward_impl.3} parent=5 // pred_check
      _
    $region30: #{_train_forward_impl.3} parent=5 // pred_check_branch
      %162 = sbr.rel (%p159) target = $region32
    $region31: #{_train_forward_impl.3} parent=5 // pred_region
      %s163 = ssub.s32 %s9, 1
      %s164 = smul.u32 2, %s19
      %p165 = scmp.lt.s32.totalorder %s18, 1
      %s166 = scalar_select %p165, %s18, 1
      %p167 = scmp.lt.s32.totalorder %s164, 1
      %s168 = scalar_select %p167, %s164, 1
      %s169 = smul.addr %s166, 2
      %s170 = sadd.s32 %s168, %s169
      %s171 = smul.addr %s170, 4
      %s172 = scalar_lea.vmem %s0, %s171
      %p173 = pneg %p49
      %p174 = pneg %p46
      %p175 = pneg %p70
      %p176 = pneg %p67
      %p177 = pneg %p91
      %p178 = pneg %p88
      %p179 = pneg %p119
      %p180 = pneg %p116
      %s181 = smul.u32 2, %s19
      %p182 = scmp.lt.s32.totalorder %s18, 1
      %s183 = scalar_select %p182, %s18, 1
      %p184 = scmp.lt.s32.totalorder %s181, 1
      %s185 = scalar_select %p184, %s181, 1
      %s186 = smul.addr %s183, 2
      %s187 = sadd.s32 %s185, %s186
      %s188 = smul.addr %s187, 4
      %s189 = scalar_lea.vmem %s3, %s188
      %s190 = smul.u32 2, %s19
      %p191 = scmp.lt.s32.totalorder %s18, 1
      %s192 = scalar_select %p191, %s18, 1
      %p193 = scmp.lt.s32.totalorder %s190, 1
      %s194 = scalar_select %p193, %s190, 1
      %s195 = smul.addr %s192, 2
      %s196 = sadd.s32 %s194, %s195
      %s197 = smul.addr %s196, 4
      %s198 = scalar_lea.vmem %s0, %s197
      %s199 = smul.u32 2, %s19
      %s200 = smul.u32 2, %s19
      %p201 = scmp.lt.s32.totalorder %s18, 1
      %s202 = scalar_select %p201, %s18, 1
      %p203 = scmp.lt.s32.totalorder %s200, 1
      %s204 = scalar_select %p203, %s200, 1
      %s205 = smul.addr %s202, 2
      %s206 = sadd.s32 %s204, %s205
      %s207 = smul.addr %s206, 4
      %s208 = scalar_lea.vmem %s3, %s207
      %s209 = smul.u32 2, %s19
      %v210 = vld [vmem:[%s198] sm:$0xff]
      %v211 = vld [vmem:[%s1] sm:$0xf]
      %213 = vset.pattern.permute.xlu0 0
      %214 = vperm.xlu0 %213, %v211
      %v215 = vpop.permute.xlu0 %214
      %v217 = vunpack.c.l.s4 839922192
      %v218 = vunpack.c.0.s8 %v217
      %v219 = vlaneseq
      %v220 = vshrl.u32 %v219, 7
      %v221 = vsub.s32 %v218, %v220
      %v222 = vrot.slane %v215, %v221
      %v224 = vmul.f32 %v210, %v222
      %v225 = vld [vmem:[%s2] sm:$0xf]
      %227 = vset.pattern.permute.xlu0 0
      %228 = vperm.xlu0 %227, %v225
      %v229 = vpop.permute.xlu0 %228
      %v231 = vunpack.c.l.s4 839922192
      %v232 = vunpack.c.0.s8 %v231
      %v233 = vlaneseq
      %v234 = vshrl.u32 %v233, 7
      %v235 = vsub.s32 %v232, %v234
      %v236 = vrot.slane %v229, %v235
      %v238 = vadd.f32 %v224, %v236
      %239 = vst [vmem:[%s208] sm:$0xff] %v238
      %s240 = smul.u32 2, %s19
      %p241 = scmp.lt.s32.totalorder %s18, 1
      %s242 = scalar_select %p241, %s18, 1
      %p243 = scmp.lt.s32.totalorder %s240, 1
      %s244 = scalar_select %p243, %s240, 1
      %s245 = smul.addr %s242, 2
      %s246 = sadd.s32 %s244, %s245
      %s247 = smul.addr %s246, 4
      %s248 = scalar_lea.vmem %s3, %s247
      // Predicated region
      $region33: #{_train_forward_impl.3} parent=31 // pred_check
        %p249 = pneg %p116
      $region34: #{_train_forward_impl.3} parent=31 // pred_check_branch
        %251 = sbr.rel (%p249) target = $region36
      $region35: #{_train_forward_impl.3} parent=31 // pred_region
        %s252 = smul.u32 2, %s19
      $region36: #{_train_forward_impl.3} parent=31 // pred_fallthru
        _
    $region32: #{_train_forward_impl.3} parent=5 // pred_fallthru
      _
    %p253 = scmp.le.s32.totalorder 2, %s9
    // Predicated region
    $region37: #{_train_forward_impl.3} parent=5 // pred_check
      %p254 = pneg %p253
    $region38: #{_train_forward_impl.3} parent=5 // pred_check_branch
      %256 = sbr.rel (%p254) target = $region40
    $region39: #{_train_forward_impl.3} parent=5 // pred_region
      %s257 = ssub.s32 %s9, 2
      // Predicated region
      $region41: #{_train_forward_impl.3} parent=39 // pred_check
        %p258 = pneg %p122
      $region42: #{_train_forward_impl.3} parent=39 // pred_check_branch
        %260 = sbr.rel (%p258) target = $region44
      $region43: #{_train_forward_impl.3} parent=39 // pred_region
        %s261 = smul.u32 2, %s21
        %p262 = scmp.lt.s32.totalorder %s20, 1
        %s263 = scalar_select %p262, %s20, 1
        %p264 = scmp.lt.s32.totalorder %s261, 1
        %s265 = scalar_select %p264, %s261, 1
        %s266 = smul.addr %s263, 2
        %s267 = sadd.s32 %s265, %s266
        %s268 = smul.addr %s267, 4
        %s269 = scalar_lea.vmem %s3, %s268
      $region44: #{_train_forward_impl.3} parent=39 // pred_fallthru
        _
    $region40: #{_train_forward_impl.3} parent=5 // pred_fallthru
      _
  $region6: #{_train_forward_impl.3} parent=0 // loop_footer
    %s13 = sadd.s32 1, %s9
  $region7: #{_train_forward_impl.3} parent=0 // loop_footer_branch
    %8 = sbr.rel target = $region3
  $region8: #{_train_forward_impl.3} parent=0 // loop_exit
    _

// kernel: _train_forward_impl.2
$region0: #{_train_forward_impl.2}
  #allocation0 [shape = 'u32[]', space=smem, size = 0x4, offset = 0x4, fixed_abs, tag = 'smem constant byte address 0x4 - core index']
  #allocation1 [shape = 'u32[144,128]{1,0:T(1,128)}', space=vmem, size = 0x12000, scoped, tag = 'internal scratch']
  %s0 = inlined_call_operand.vmem [shape: f32[2,4,256], index: 0, kind: input, shape index: {}]
  %s1 = inlined_call_operand.vmem [shape: f32[1,4,1], index: 1, kind: input, shape index: {}]
  %s2 = inlined_call_operand.vmem [shape: f32[2,4,1], index: 2, kind: output, shape index: {0}]
  %s3 = inlined_call_operand.vmem [shape: f32[2,4,1], index: 3, kind: output, shape index: {1}]
  %4 = xla_tuple %s2, %s3
  %s5 = sld [smem:[#allocation0]]
  $region53: #{_train_forward_impl.2} parent=0
    _
  %s7 = ssub.s32 1, %s5
  %s8 = scalar_select 0, %s7, %s5
  loop: start=0, step=1, limit=4
  $region2: #{_train_forward_impl.2} parent=0 // loop_pre_header
    _
  $region3: #{_train_forward_impl.2} parent=0 // loop_header
    %s10 = sphi 0, %s14
    %p11 = scmp.ge.s32.totalorder %s10, 4
    %s17 = sphi 0, %s36
    %s18 = sphi 0, %s32
    %s19 = sphi 0, %s28
    %s20 = sphi 0, %s17
    %s21 = sphi 0, %s18
    %s22 = sphi 0, %s19
    %s23 = sphi 0, %s20
    %s24 = sphi 0, %s21
    %s25 = sphi 0, %s22
    %s43 = sphi 0, %s45
    %s46 = sphi 0, %s43
    %s47 = sphi 0, %s46
    %s63 = sphi 0, %s47
    %s67 = sphi 0, %s67
    %s69 = sphi 0, %s67
    %s70 = sphi 0, %s69
    %s84 = sphi 0, %s70
    %s92 = sphi 0, %s94
    %s95 = sphi 0, %s92
    %s96 = sphi 0, %s95
    %s112 = sphi 0, %s96
    %s120 = sphi 0, %s122
    %s123 = sphi 0, %s120
    %s124 = sphi 0, %s123
    %s140 = sphi 0, %s124
  $region4: #{_train_forward_impl.2} parent=0 // loop_header_branch
    %13 = sbr.rel (%p11) target = $region8
  $region5: #{_train_forward_impl.2} parent=0 // loop_body
    %s15 = ssub.s32 %s10, 1
    %s16 = ssub.s32 %s10, 2
    %s26 = sadd.s32 1, %s19
    %p27 = scmp.ge.s32.totalorder %s26, 1
    %s28 = scalar_select %p27, 0, %s26
    %s29 = sadd.s32 1, %s18
    %s30 = scalar_select %p27, %s29, %s18
    %p31 = scmp.ge.s32.totalorder %s30, 1
    %s32 = scalar_select %p31, 0, %s30
    %s33 = sadd.s32 1, %s17
    %s34 = scalar_select %p31, %s33, %s17
    %p35 = scmp.ge.s32.totalorder %s34, 2
    %s36 = scalar_select %p35, 0, %s34
    %s37 = sadd.s32 %s18, %s19
    %s38 = sadd.s32 %s32, %s28
    %s39 = ssub.s32 %s17, %s36
    %s40 = ssub.s32 %s37, %s38
    %s41 = sor.u32 %s39, %s40
    %p42 = scmp.eq.s32.totalorder %s41, 0
    %s44 = sadd.s32 %s43, 1
    %s45 = scalar_select %p42, %s43, %s44
    %p48 = pneg %p42
    %p49 = scmp.eq.s32.totalorder %s10, 1
    %p50 = por %p48, %p49
    %p51 = scmp.ne.s32.totalorder %s43, %s46
    %p52 = scmp.eq.s32.totalorder %s10, 0
    %p53 = por %p51, %p52
    %p54 = scmp.ne.s32.totalorder %s43, %s46
    %p55 = scmp.eq.s32.totalorder %s15, 1
    %p56 = por %p54, %p55
    %p57 = scmp.ne.s32.totalorder %s46, %s47
    %p58 = scmp.eq.s32.totalorder %s15, 0
    %p59 = por %p57, %p58
    %p60 = scmp.ne.s32.totalorder %s46, %s47
    %p61 = scmp.eq.s32.totalorder %s16, 1
    %p62 = por %p60, %p61
    %p64 = scmp.ne.s32.totalorder %s47, %s63
    %p65 = scmp.eq.s32.totalorder %s16, 0
    %p66 = por %p64, %p65
    %s68 = sadd.s32 %s67, 1
    %p71 = scmp.eq.s32.totalorder %s10, 1
    %p72 = scmp.ne.s32.totalorder %s67, %s69
    %p73 = scmp.eq.s32.totalorder %s10, 0
    %p74 = por %p72, %p73
    %p75 = scmp.ne.s32.totalorder %s67, %s69
    %p76 = scmp.eq.s32.totalorder %s15, 1
    %p77 = por %p75, %p76
    %p78 = scmp.ne.s32.totalorder %s69, %s70
    %p79 = scmp.eq.s32.totalorder %s15, 0
    %p80 = por %p78, %p79
    %p81 = scmp.ne.s32.totalorder %s69, %s70
    %p82 = scmp.eq.s32.totalorder %s16, 1
    %p83 = por %p81, %p82
    %p85 = scmp.ne.s32.totalorder %s70, %s84
    %p86 = scmp.eq.s32.totalorder %s16, 0
    %p87 = por %p85, %p86
    %s88 = sadd.s32 %s17, %s18
    %s89 = sadd.s32 %s36, %s32
    %s90 = ssub.s32 %s88, %s89
    %p91 = scmp.eq.s32.totalorder %s90, 0
    %s93 = sadd.s32 %s92, 1
    %s94 = scalar_select %p91, %s92, %s93
    %p97 = pneg %p91
    %p98 = scmp.eq.s32.totalorder %s10, 1
    %p99 = por %p97, %p98
    %p100 = scmp.ne.s32.totalorder %s92, %s95
    %p101 = scmp.eq.s32.totalorder %s10, 0
    %p102 = por %p100, %p101
    %p103 = scmp.ne.s32.totalorder %s92, %s95
    %p104 = scmp.eq.s32.totalorder %s15, 1
    %p105 = por %p103, %p104
    %p106 = scmp.ne.s32.totalorder %s95, %s96
    %p107 = scmp.eq.s32.totalorder %s15, 0
    %p108 = por %p106, %p107
    %p109 = scmp.ne.s32.totalorder %s95, %s96
    %p110 = scmp.eq.s32.totalorder %s16, 1
    %p111 = por %p109, %p110
    %p113 = scmp.ne.s32.totalorder %s96, %s112
    %p114 = scmp.eq.s32.totalorder %s16, 0
    %p115 = por %p113, %p114
    %s116 = sadd.s32 %s17, %s18
    %s117 = sadd.s32 %s36, %s32
    %s118 = ssub.s32 %s116, %s117
    %p119 = scmp.eq.s32.totalorder %s118, 0
    %s121 = sadd.s32 %s120, 1
    %s122 = scalar_select %p119, %s120, %s121
    %p125 = pneg %p119
    %p126 = scmp.eq.s32.totalorder %s10, 1
    %p127 = por %p125, %p126
    %p128 = scmp.ne.s32.totalorder %s120, %s123
    %p129 = scmp.eq.s32.totalorder %s10, 0
    %p130 = por %p128, %p129
    %p131 = scmp.ne.s32.totalorder %s120, %s123
    %p132 = scmp.eq.s32.totalorder %s15, 1
    %p133 = por %p131, %p132
    %p134 = scmp.ne.s32.totalorder %s123, %s124
    %p135 = scmp.eq.s32.totalorder %s15, 0
    %p136 = por %p134, %p135
    %p137 = scmp.ne.s32.totalorder %s123, %s124
    %p138 = scmp.eq.s32.totalorder %s16, 1
    %p139 = por %p137, %p138
    %p141 = scmp.ne.s32.totalorder %s124, %s140
    %p142 = scmp.eq.s32.totalorder %s16, 0
    %p143 = por %p141, %p142
    %p144 = scmp.le.s32.totalorder 1, %s10
    %p145 = scmp.lt.s32.totalorder %s10, 3
    %p146 = pnand %p144, %p145
    %p147 = pneg %p146
    // Predicated region
    $region9: #{_train_forward_impl.2} parent=5 // pred_check
      _
    $region10: #{_train_forward_impl.2} parent=5 // pred_check_branch
      %149 = sbr.rel (%p146) target = $region12
    $region11: #{_train_forward_impl.2} parent=5 // pred_region
      %s150 = ssub.s32 %s10, 1
      // Predicated region
      $region13: #{_train_forward_impl.2} parent=11 // pred_check
        %p151 = pneg %p80
      $region14: #{_train_forward_impl.2} parent=11 // pred_check_branch
        %153 = sbr.rel (%p151) target = $region16
      $region15: #{_train_forward_impl.2} parent=11 // pred_region
        _
      $region16: #{_train_forward_impl.2} parent=11 // pred_fallthru
        _
    $region12: #{_train_forward_impl.2} parent=5 // pred_fallthru
      _
    %p154 = scmp.lt.s32.totalorder %s10, 2
    // Predicated region
    $region17: #{_train_forward_impl.2} parent=5 // pred_check
      %p155 = pneg %p154
    $region18: #{_train_forward_impl.2} parent=5 // pred_check_branch
      %157 = sbr.rel (%p155) target = $region20
    $region19: #{_train_forward_impl.2} parent=5 // pred_region
      // Predicated region
      $region21: #{_train_forward_impl.2} parent=19 // pred_check
        %p158 = pneg %p53
      $region22: #{_train_forward_impl.2} parent=19 // pred_check_branch
        %160 = sbr.rel (%p158) target = $region24
      $region23: #{_train_forward_impl.2} parent=19 // pred_region
        %s161 = sadd.s32 %s18, %s19
        %s162 = smul.u32 2, %s161
        %p163 = scmp.lt.s32.totalorder %s17, 1
        %s164 = scalar_select %p163, %s17, 1
        %p165 = scmp.lt.s32.totalorder %s162, 1
        %s166 = scalar_select %p165, %s162, 1
        %s167 = smul.addr %s164, 2
        %s168 = sadd.s32 %s166, %s167
        %s169 = smul.addr %s168, 4
        %s170 = scalar_lea.vmem %s0, %s169
        %s171 = sadd.s32 %s18, %s19
        %s172 = smul.u32 2, %s171
      $region24: #{_train_forward_impl.2} parent=19 // pred_fallthru
        _
    $region20: #{_train_forward_impl.2} parent=5 // pred_fallthru
      _
    %p173 = scmp.le.s32.totalorder 1, %s10
    %p174 = scmp.lt.s32.totalorder %s10, 3
    %p175 = pnand %p173, %p174
    %p176 = pneg %p175
    // Predicated region
    $region25: #{_train_forward_impl.2} parent=5 // pred_check
      _
    $region26: #{_train_forward_impl.2} parent=5 // pred_check_branch
      %178 = sbr.rel (%p175) target = $region28
    $region27: #{_train_forward_impl.2} parent=5 // pred_region
      %s179 = ssub.s32 %s10, 1
      %s180 = sadd.s32 %s21, %s22
      %s181 = smul.u32 2, %s180
      %p182 = scmp.lt.s32.totalorder %s20, 1
      %s183 = scalar_select %p182, %s20, 1
      %p184 = scmp.lt.s32.totalorder %s181, 1
      %s185 = scalar_select %p184, %s181, 1
      %s186 = smul.addr %s183, 2
      %s187 = sadd.s32 %s185, %s186
      %s188 = smul.addr %s187, 4
      %s189 = scalar_lea.vmem %s0, %s188
      %p190 = pneg %p59
      %p191 = pneg %p56
      %p192 = pneg %p80
      %p193 = pneg %p77
      %p194 = pneg %p108
      %p195 = pneg %p105
      %s196 = sadd.s32 %s20, %s21
      %p197 = scmp.lt.s32.totalorder %s196, 1
      %s198 = scalar_select %p197, %s196, 1
      %s199 = smul.addr %s198, 4
      %s200 = scalar_lea.vmem %s2, %s199
      %p201 = pneg %p136
      %p202 = pneg %p133
      %s203 = sadd.s32 %s20, %s21
      %p204 = scmp.lt.s32.totalorder %s203, 1
      %s205 = scalar_select %p204, %s203, 1
      %s206 = smul.addr %s205, 4
      %s207 = scalar_lea.vmem %s3, %s206
      %s208 = sadd.s32 %s21, %s22
      %s209 = smul.u32 2, %s208
      %p210 = scmp.lt.s32.totalorder %s20, 1
      %s211 = scalar_select %p210, %s20, 1
      %p212 = scmp.lt.s32.totalorder %s209, 1
      %s213 = scalar_select %p212, %s209, 1
      %s214 = smul.addr %s211, 2
      %s215 = sadd.s32 %s213, %s214
      %s216 = smul.addr %s215, 4
      %s217 = scalar_lea.vmem %s0, %s216
      %s218 = sadd.s32 %s21, %s22
      %s219 = smul.u32 2, %s218
      %s220 = sadd.s32 %s20, %s21
      %p221 = scmp.lt.s32.totalorder %s220, 1
      %s222 = scalar_select %p221, %s220, 1
      %s223 = smul.addr %s222, 4
      %s224 = scalar_lea.vmem %s2, %s223
      %s225 = sadd.s32 %s20, %s21
      %s226 = sadd.s32 %s20, %s21
      %p227 = scmp.lt.s32.totalorder %s226, 1
      %s228 = scalar_select %p227, %s226, 1
      %s229 = smul.addr %s228, 4
      %s230 = scalar_lea.vmem %s3, %s229
      %s231 = sadd.s32 %s20, %s21
      %p232 = scmp.eq.s32.totalorder %s22, 0
      // Predicated region
      $region29: #{_train_forward_impl.2} parent=27 // pred_check
        %p233 = pneg %p232
      $region30: #{_train_forward_impl.2} parent=27 // pred_check_branch
        %235 = sbr.rel (%p233) target = $region32
      $region31: #{_train_forward_impl.2} parent=27 // pred_region
        %vm236 = vcmask 3072
        %237 = vst.msk [vmem:[%s224] sm:$0xf] %vm236, 0.0
        %238 = vst.msk [vmem:[%s230] sm:$0xf] %vm236, 0.0
      $region32: #{_train_forward_impl.2} parent=27 // pred_fallthru
        _
      %v239 = vld [vmem:[%s217] sm:$0xff]
      %v240 = vld [vmem:[%s1] sm:$0xf]
      %242 = vset.pattern.permute.xlu0 0
      %243 = vperm.xlu0 %242, %v240
      %v244 = vpop.permute.xlu0 %243
      %v246 = vunpack.c.l.s4 839922192
      %v247 = vunpack.c.0.s8 %v246
      %v248 = vlaneseq
      %v249 = vshrl.u32 %v248, 7
      %v250 = vsub.s32 %v247, %v249
      %v251 = vrot.slane %v244, %v250
      %v253 = vsub.f32 %v239, %v251
      %v254 = vld [vmem:[%s224] sm:$0xf]
      %v256 = vcombine.high %v253, %v253
      %vm258 = vcmask 1043456
      %v259 = vsel %vm258, %v253, 0.0
      %v260 = vsel %vm258, %v256, 0.0
      %v261 = vadd.f32 %v259, %v260
      %262 = vadd.xlane.f32.xlu0 %v261
      %v263 = vpop.xlane.xlu0 %262
      %v264 = vadd.f32 %v254, %v263
      %vm265 = vcmask 3072
      %266 = vst.msk [vmem:[%s224] sm:$0xf] %vm265, %v264
      %v267 = vld [vmem:[%s230] sm:$0xf]
      %v268 = vmul.f32 %v253, %v253
      %v270 = vcombine.high %v268, %v268
      %v272 = vsel %vm258, %v268, 0.0
      %v273 = vsel %vm258, %v270, 0.0
      %v274 = vadd.f32 %v272, %v273
      %275 = vadd.xlane.f32.xlu0 %v274
      %v276 = vpop.xlane.xlu0 %275
      %v277 = vadd.f32 %v267, %v276
      %278 = vst.msk [vmem:[%s230] sm:$0xf] %vm265, %v277
      %s279 = sadd.s32 %s20, %s21
      %p280 = scmp.lt.s32.totalorder %s279, 1
      %s281 = scalar_select %p280, %s279, 1
      %s282 = smul.addr %s281, 4
      %s283 = scalar_lea.vmem %s2, %s282
      %s284 = sadd.s32 %s20, %s21
      %p285 = scmp.lt.s32.totalorder %s284, 1
      %s286 = scalar_select %p285, %s284, 1
      %s287 = smul.addr %s286, 4
      %s288 = scalar_lea.vmem %s3, %s287
      // Predicated region
      $region33: #{_train_forward_impl.2} parent=27 // pred_check
        %p289 = pneg %p105
      $region34: #{_train_forward_impl.2} parent=27 // pred_check_branch
        %291 = sbr.rel (%p289) target = $region36
      $region35: #{_train_forward_impl.2} parent=27 // pred_region
        %s292 = sadd.s32 %s20, %s21
      $region36: #{_train_forward_impl.2} parent=27 // pred_fallthru
        _
      // Predicated region
      $region37: #{_train_forward_impl.2} parent=27 // pred_check
        %p293 = pneg %p133
      $region38: #{_train_forward_impl.2} parent=27 // pred_check_branch
        %295 = sbr.rel (%p293) target = $region40
      $region39: #{_train_forward_impl.2} parent=27 // pred_region
        %s296 = sadd.s32 %s20, %s21
      $region40: #{_train_forward_impl.2} parent=27 // pred_fallthru
        _
    $region28: #{_train_forward_impl.2} parent=5 // pred_fallthru
      _
    %p297 = scmp.le.s32.totalorder 2, %s10
    // Predicated region
    $region41: #{_train_forward_impl.2} parent=5 // pred_check
      %p298 = pneg %p297
    $region42: #{_train_forward_impl.2} parent=5 // pred_check_branch
      %300 = sbr.rel (%p298) target = $region44
    $region43: #{_train_forward_impl.2} parent=5 // pred_region
      %s301 = ssub.s32 %s10, 2
      // Predicated region
      $region45: #{_train_forward_impl.2} parent=43 // pred_check
        %p302 = pneg %p111
      $region46: #{_train_forward_impl.2} parent=43 // pred_check_branch
        %304 = sbr.rel (%p302) target = $region48
      $region47: #{_train_forward_impl.2} parent=43 // pred_region
        %s305 = sadd.s32 %s23, %s24
        %p306 = scmp.lt.s32.totalorder %s305, 1
        %s307 = scalar_select %p306, %s305, 1
        %s308 = smul.addr %s307, 4
        %s309 = scalar_lea.vmem %s2, %s308
      $region48: #{_train_forward_impl.2} parent=43 // pred_fallthru
        _
      // Predicated region
      $region49: #{_train_forward_impl.2} parent=43 // pred_check
        %p310 = pneg %p139
      $region50: #{_train_forward_impl.2} parent=43 // pred_check_branch
        %312 = sbr.rel (%p310) target = $region52
      $region51: #{_train_forward_impl.2} parent=43 // pred_region
        %s313 = sadd.s32 %s23, %s24
        %p314 = scmp.lt.s32.totalorder %s313, 1
        %s315 = scalar_select %p314, %s313, 1
        %s316 = smul.addr %s315, 4
        %s317 = scalar_lea.vmem %s3, %s316
      $region52: #{_train_forward_impl.2} parent=43 // pred_fallthru
        _
    $region44: #{_train_forward_impl.2} parent=5 // pred_fallthru
      _
  $region6: #{_train_forward_impl.2} parent=0 // loop_footer
    %s14 = sadd.s32 1, %s10
  $region7: #{_train_forward_impl.2} parent=0 // loop_footer_branch
    %9 = sbr.rel target = $region3
  $region8: #{_train_forward_impl.2} parent=0 // loop_exit
    _

</llo_original>
